<compile_context>
chip_gen: v6e
topology: v6e:2x2x1
jax: 0.10.0
libtpu: 0.0.40
codegen_flags: <defaults>
</compile_context>

<pallas_src>
import math

import jax
import jax.numpy as jnp
import numpy as np
from jax.experimental import pallas as pl
from jax.experimental.pallas import tpu as pltpu


# ----------------------------- Pallas kernels -----------------------------

def _pe_add_tiled_kernel(x_ref, pe_ref, out_ref):
    # x_ref / out_ref: (TS, E) slab of one batch element (batch dim squeezed).
    # pe_ref:          (TS, E) positional-encoding tile, reused across batch.
    out_ref[...] = (x_ref[...] + pe_ref[...]).astype(out_ref.dtype)
    # TODO(synk): nn.Dropout(p=drop) is identity in eval mode; training-mode
    # dropout (pltpu.prng_seed / prng_random_bits masking) is not implemented.


def _pe_add_fused_kernel(x_ref, pe_ref, out_ref):
    # Small-problem path: one grid step over the whole (B, S, E) slab.
    out_ref[...] = (x_ref[...] + pe_ref[...][None, :, :]).astype(out_ref.dtype)


# ----------------------------- PE table -----------------------------

def make_position_encoding_table(max_seq_len: int, embedding_dim: int,
                                 dtype=jnp.float32) -> jnp.ndarray:
    """Same sinusoidal table as the PyTorch constructor, shape (max_seq_len, E)."""
    positions = jnp.arange(max_seq_len, dtype=jnp.float32)[:, None]
    div_term = jnp.exp(
        jnp.arange(0, embedding_dim, 2, dtype=jnp.float32)
        * (-math.log(10000.0) / embedding_dim)
    )
    pe = jnp.zeros((max_seq_len, embedding_dim), jnp.float32)
    pe = pe.at[:, 0::2].set(jnp.sin(positions * div_term))
    pe = pe.at[:, 1::2].set(jnp.cos(positions * div_term))
    return pe.astype(dtype)


# ----------------------------- tiling helpers -----------------------------

def _sublane(itemsize: int) -> int:
    # 8 rows for 4-byte, 16 for 2-byte, 32 for 1-byte dtypes.
    return max(8, 32 // itemsize)


def _pick_seq_tile(S: int, E: int, itemsize: int,
                   target_bytes: int = 2 * 1024 * 1024) -> int:
    """Largest sublane-aligned divisor of S whose (TS, E) block is ~<= target_bytes."""
    sub = _sublane(itemsize)
    row_bytes = E * itemsize
    max_rows = max(sub, (target_bytes // max(row_bytes, 1)) // sub * sub)
    if S <= max_rows:
        return S
    ts = min((max_rows // sub) * sub, (S // sub) * sub)
    while ts >= sub:
        if S % ts == 0:
            return ts
        ts -= sub
    return S  # fallback: full sequence (block == full dim, always legal)


# ----------------------------- wrapper -----------------------------

def position_encoding(x: jnp.ndarray, pe_table: jnp.ndarray, *,
                      seq_tile: int | None = None,
                      donate_x: bool = False,
                      small_problem_bytes: int = 2 * 1024 * 1024):
    """out = x + pe_table[:S] broadcast over batch. x: (B, S, E)."""
    B, S, E = x.shape
    max_seq_len, E_pe = pe_table.shape
    assert E == E_pe, "embedding dim mismatch"
    assert S <= max_seq_len, (
        f"Sequence length {S} exceeds position encoding length {max_seq_len}"
    )

    # One-time dtype alignment (prefer building the table in the model dtype):
    # keeps the add single-dtype and halves the PE HBM read for bf16 models.
    if pe_table.dtype != x.dtype:
        pe_table = pe_table.astype(x.dtype)

    itemsize = jnp.dtype(x.dtype).itemsize
    sub = _sublane(itemsize)
    aliases = {0: 0} if donate_x else {}

    # --- small-problem fast path: one grid step over the whole slab. ---
    x_bytes = B * S * E * itemsize
    if (seq_tile is None and x_bytes <= small_problem_bytes
            and (S % sub == 0 or S == max_seq_len)):
        return pl.pallas_call(
            _pe_add_fused_kernel,
            out_shape=jax.ShapeDtypeStruct((B, S, E), x.dtype),
            grid=(1,),
            in_specs=[
                pl.BlockSpec((B, S, E), lambda i: (0, 0, 0)),  # whole x slab
                pl.BlockSpec((S, E), lambda i: (0, 0)),        # first S rows of PE
            ],
            out_specs=pl.BlockSpec((B, S, E), lambda i: (0, 0, 0)),
            input_output_aliases=aliases,
        )(x, pe_table)

    # --- general tiled path ---
    TS = _pick_seq_tile(S, E, itemsize) if seq_tile is None else seq_tile
    assert S % TS == 0, "seq_tile must divide the sequence length"

    if TS % sub != 0:
        # Irregular sequence length: fall back to a host-sliced PE so its block
        # equals the full array dim (keeps the (8,128) rule satisfied).
        assert TS == S, "non-sublane-aligned seq_tile only supported when TS == S"
        pe_table = pe_table[:S]

    # Sequence axis OUTER, batch axis INNER: PE block index is constant across
    # the inner axis, so Pallas reuses the resident PE tile instead of
    # re-fetching it for every batch element.
    grid = (S // TS, B)
    return pl.pallas_call(
        _pe_add_tiled_kernel,
        out_shape=jax.ShapeDtypeStruct((B, S, E), x.dtype),
        grid=grid,
        in_specs=[
            pl.BlockSpec((None, TS, E), lambda s, b: (b, s, 0)),  # x slab
            pl.BlockSpec((TS, E), lambda s, b: (s, 0)),           # PE tile (batch-invariant)
        ],
        out_specs=pl.BlockSpec((None, TS, E), lambda s, b: (b, s, 0)),
        input_output_aliases=aliases,
        compiler_params=pltpu.CompilerParams(
            dimension_semantics=("parallel", "parallel"),
        ),
    )(x, pe_table)


# ----------------------------- pure-JAX reference -----------------------------

def ref_position_encoding(x, pe_table):
    S = x.shape[1]
    return x + pe_table.astype(x.dtype)[None, :S, :]


# ----------------------------- main -----------------------------

if __name__ == "__main__":
    key = jax.random.PRNGKey(0)

    # Case 1: small f32 problem -> single-step fused path (no per-batch step cost).
    B, S, E, MAX_LEN = 4, 16, 128, 32
    x = jax.random.normal(key, (B, S, E), jnp.float32)
    pe_table = make_position_encoding_table(MAX_LEN, E, jnp.float32)

    out = jax.block_until_ready(position_encoding(x, pe_table))
    np.testing.assert_allclose(
        np.asarray(out), np.asarray(ref_position_encoding(x, pe_table)),
        rtol=1e-6, atol=1e-6)

    # Case 2: bf16, tiled path (seq-outer / batch-inner grid, PE tile reused).
    B2, S2, E2, MAX_LEN2 = 2, 128, 256, 256
    k1, _ = jax.random.split(key)
    x2 = jax.random.normal(k1, (B2, S2, E2), jnp.float32).astype(jnp.bfloat16)
    pe_table2 = make_position_encoding_table(MAX_LEN2, E2, jnp.bfloat16)

    out2 = jax.block_until_ready(position_encoding(x2, pe_table2, seq_tile=32))
    ref2 = ref_position_encoding(x2, pe_table2)
    np.testing.assert_allclose(
        np.asarray(out2).astype(np.float32),
        np.asarray(ref2).astype(np.float32),
        rtol=2e-2, atol=2e-2)

    print("KERNEL_OK")
</pallas_src>

<mosaic_0001>
module attributes {stable_mosaic.version = 11 : i64} {
  func.func @_pe_add_fused_kernel(%arg0: i32, %arg1: memref<4x16x128xf32, #tpu.memory_space<vmem>>, %arg2: memref<16x128xf32, #tpu.memory_space<vmem>>, %arg3: memref<4x16x128xf32, #tpu.memory_space<vmem>>) attributes {dimension_semantics = [#tpu.dimension_semantics<arbitrary>], iteration_bounds = array<i64: 1>, scalar_prefetch = 0 : i64, scratch_operands = 0 : i64, tpu.core_type = #tpu.core_type<tc>, window_params = [{pipeline_mode = #tpu.pipeline_mode<synchronous>, transform_indices = @transform_0, window_bounds = array<i64: 4, 16, 128>}, {transform_indices = @transform_1, window_bounds = array<i64: 16, 128>}, {pipeline_mode = #tpu.pipeline_mode<synchronous>, transform_indices = @transform_2, window_bounds = array<i64: 4, 16, 128>}]} {
    %c0 = arith.constant 0 : index
    %c0_0 = arith.constant 0 : index
    %c0_1 = arith.constant 0 : index
    %0 = vector.load %arg1[%c0, %c0_0, %c0_1] : memref<4x16x128xf32, #tpu.memory_space<vmem>>, vector<4x16x128xf32>
    %c0_2 = arith.constant 0 : index
    %c0_3 = arith.constant 0 : index
    %1 = vector.load %arg2[%c0_2, %c0_3] : memref<16x128xf32, #tpu.memory_space<vmem>>, vector<16x128xf32>
    %2 = vector.shape_cast %1 : vector<16x128xf32> to vector<1x16x128xf32>
    %3 = vector.broadcast %2 : vector<1x16x128xf32> to vector<4x16x128xf32>
    %4 = arith.addf %0, %3 : vector<4x16x128xf32>
    %c0_4 = arith.constant 0 : index
    %c0_5 = arith.constant 0 : index
    %c0_6 = arith.constant 0 : index
    %5 = vector.load %arg3[%c0_4, %c0_5, %c0_6] : memref<4x16x128xf32, #tpu.memory_space<vmem>>, vector<4x16x128xf32>
    tpu.vector_store %arg3[%c0_4, %c0_5, %c0_6], %4 {strides = array<i32>} : memref<4x16x128xf32, #tpu.memory_space<vmem>>, vector<4x16x128xf32>,
    return
  }
  func.func @transform_0(%arg0: i32) -> (i32, i32, i32) {
    %c0_i32 = arith.constant 0 : i32
    %c0_i32_0 = arith.constant 0 : i32
    %c0_i32_1 = arith.constant 0 : i32
    %c0_i32_2 = arith.constant 0 : i32
    return %c0_i32, %c0_i32_0, %c0_i32_1 : i32, i32, i32
  }
  func.func @transform_1(%arg0: i32) -> (i32, i32) {
    %c0_i32 = arith.constant 0 : i32
    %c0_i32_0 = arith.constant 0 : i32
    %c0_i32_1 = arith.constant 0 : i32
    return %c0_i32, %c0_i32_0 : i32, i32
  }
  func.func @transform_2(%arg0: i32) -> (i32, i32, i32) {
    %c0_i32 = arith.constant 0 : i32
    %c0_i32_0 = arith.constant 0 : i32
    %c0_i32_1 = arith.constant 0 : i32
    %c0_i32_2 = arith.constant 0 : i32
    return %c0_i32, %c0_i32_0, %c0_i32_1 : i32, i32, i32
  }
}

</mosaic_0001>

<llo_original>
// kernel: tpu_custom_call.1
$region0: #{tpu_custom_call.1}
  #allocation0 [shape = 'u32[]', space=smem, size = 0x4, offset = 0x4, fixed_abs, tag = 'smem constant byte address 0x4 - core index']
  #allocation1 [shape = 'u32[144,128]{1,0:T(1,128)}', space=vmem, size = 0x12000, scoped, tag = 'internal scratch']
  %s0 = inlined_call_operand.hbm [shape: f32[4,16,128], index: 0, kind: input, shape index: {}]
  %s1 = inlined_call_operand.hbm [shape: f32[32,128], index: 1, kind: input, shape index: {}]
  %s2 = inlined_call_operand.hbm [shape: f32[4,16,128], index: 2, kind: output, shape index: {}]
  %s3 = sld [smem:[#allocation0]]
  $region26: #{tpu_custom_call.1} parent=0
    _
  %s5 = ssub.s32 1, %s3
  %s6 = scalar_select 0, %s5, %s3
  $region1: #{tpu_custom_call.1} parent=0
    #allocation2 [shape = 'u8[32768]{0}', space=vmem, size = 0x8000, scoped, tag = 'input window, operand 0, single buffered']
    #allocation3 [shape = 's32[1]{0}', space=sflag, size = 0x4, scoped, tag = 'scoped memory for tpu_custom_call.1']
    #allocation4 [shape = 's32[1]{0}', space=sflag, size = 0x4, scoped, tag = 'scoped memory for tpu_custom_call.1']
    #allocation5 [shape = 'u8[8192]{0}', space=vmem, size = 0x2000, scoped, tag = 'input window, operand 1, single buffered']
    #allocation6 [shape = 's32[1]{0}', space=sflag, size = 0x4, scoped, tag = 'scoped memory for tpu_custom_call.1']
    #allocation7 [shape = 'u8[32768]{0}', space=vmem, size = 0x8000, scoped, tag = 'output window, operand 0, single buffered']
    %7 = vsyncpa [#allocation3], 0
    %8 = vsyncpa [#allocation6], 0
    %9 = vsyncpa [#allocation4], 0
    // Predicated region
    $region2: #{tpu_custom_call.1} parent=1 // pred_check
      _
    $region3: #{tpu_custom_call.1} parent=1 // pred_check_branch
      %11 = sbr.rel (0) target = $region5
    $region4: #{tpu_custom_call.1} parent=1 // pred_region
      %s13 = ssub.s32 1024, 1024
      %14 = vsyncadd [#allocation3], %s13
      %s15 = sshll.u32 [#allocation2], 4
      %s16 = int_to_ptr.vmem [resolvable:$true] %s15
      %21 = dma.hbm_to_vmem [thread:$0]  %s0, 1024, %s16, [#allocation3], 128, 128, 8
    $region5: #{tpu_custom_call.1} parent=1 // pred_fallthru
      _
    // Predicated region
    $region6: #{tpu_custom_call.1} parent=1 // pred_check
      _
    $region7: #{tpu_custom_call.1} parent=1 // pred_check_branch
      %23 = sbr.rel (0) target = $region9
    $region8: #{tpu_custom_call.1} parent=1 // pred_region
      %s25 = ssub.s32 256, 256
      %26 = vsyncadd [#allocation6], %s25
      %s27 = sshll.u32 [#allocation5], 4
      %s28 = int_to_ptr.vmem [resolvable:$true] %s27
      %33 = dma.hbm_to_vmem [thread:$0]  %s1, 256, %s28, [#allocation6], 128, 128, 8
    $region9: #{tpu_custom_call.1} parent=1 // pred_fallthru
      _
    // Predicated region
    $region10: #{tpu_custom_call.1} parent=1 // pred_check
      _
    $region11: #{tpu_custom_call.1} parent=1 // pred_check_branch
      %35 = sbr.rel (0) target = $region13
    $region12: #{tpu_custom_call.1} parent=1 // pred_region
      %36 = dma.done [#allocation3], 1024
    $region13: #{tpu_custom_call.1} parent=1 // pred_fallthru
      _
    // Predicated region
    $region14: #{tpu_custom_call.1} parent=1 // pred_check
      _
    $region15: #{tpu_custom_call.1} parent=1 // pred_check_branch
      %38 = sbr.rel (0) target = $region17
    $region16: #{tpu_custom_call.1} parent=1 // pred_region
      %39 = dma.done [#allocation6], 256
    $region17: #{tpu_custom_call.1} parent=1 // pred_fallthru
      _
    %v40 = vld [vmem:[#allocation2] sm:$0xff]
    %v41 = vld [vmem:[#allocation2 + $0x8] sm:$0xff]
    %v42 = vld [vmem:[#allocation2 + $0x10] sm:$0xff]
    %v43 = vld [vmem:[#allocation2 + $0x18] sm:$0xff]
    %v44 = vld [vmem:[#allocation2 + $0x20] sm:$0xff]
    %v45 = vld [vmem:[#allocation2 + $0x28] sm:$0xff]
    %v46 = vld [vmem:[#allocation2 + $0x30] sm:$0xff]
    %v47 = vld [vmem:[#allocation2 + $0x38] sm:$0xff]
    %v48 = vld [vmem:[#allocation5] sm:$0xff]
    %v49 = vld [vmem:[#allocation5 + $0x8] sm:$0xff]
    %v50 = vadd.f32 %v40, %v48
    %v51 = vadd.f32 %v41, %v49
    %v52 = vadd.f32 %v42, %v48
    %v53 = vadd.f32 %v43, %v49
    %v54 = vadd.f32 %v44, %v48
    %v55 = vadd.f32 %v45, %v49
    %v56 = vadd.f32 %v46, %v48
    %v57 = vadd.f32 %v47, %v49
    %58 = vst [vmem:[#allocation7] sm:$0xff] %v50
    %59 = vst [vmem:[#allocation7 + $0x8] sm:$0xff] %v51
    %60 = vst [vmem:[#allocation7 + $0x10] sm:$0xff] %v52
    %61 = vst [vmem:[#allocation7 + $0x18] sm:$0xff] %v53
    %62 = vst [vmem:[#allocation7 + $0x20] sm:$0xff] %v54
    %63 = vst [vmem:[#allocation7 + $0x28] sm:$0xff] %v55
    %64 = vst [vmem:[#allocation7 + $0x30] sm:$0xff] %v56
    %65 = vst [vmem:[#allocation7 + $0x38] sm:$0xff] %v57
    // Predicated region
    $region18: #{tpu_custom_call.1} parent=1 // pred_check
      _
    $region19: #{tpu_custom_call.1} parent=1 // pred_check_branch
      %67 = sbr.rel (0) target = $region21
    $region20: #{tpu_custom_call.1} parent=1 // pred_region
      %s69 = ssub.s32 1024, 1024
      %70 = vsyncadd [#allocation4], %s69
      %s71 = sshll.u32 [#allocation7], 4
      %s72 = int_to_ptr.vmem [resolvable:$true] %s71
      %77 = dma.vmem_to_hbm [thread:$0]  %s72, 1024, %s2, [#allocation4], 128, 128, 8
    $region21: #{tpu_custom_call.1} parent=1 // pred_fallthru
      _
    // Predicated region
    $region22: #{tpu_custom_call.1} parent=1 // pred_check
      _
    $region23: #{tpu_custom_call.1} parent=1 // pred_check_branch
      %79 = sbr.rel (0) target = $region25
    $region24: #{tpu_custom_call.1} parent=1 // pred_region
      %80 = dma.done [#allocation4], 1024
    $region25: #{tpu_custom_call.1} parent=1 // pred_fallthru
      _
    %81 = vsyncpa [#allocation3], 1
    %82 = vsyncpa [#allocation6], 1
    %83 = vsyncpa [#allocation4], 1

</llo_original>
